<compile_context>
chip_gen: v7x
topology: tpu7x:2x2x1
jax: 0.10.0
libtpu: 0.0.40
codegen_flags: <defaults>
</compile_context>

<pallas_src>
import jax
import jax.numpy as jnp
from jax.experimental import pallas as pl
from jax.experimental.pallas import tpu as pltpu


def _round_up(v, m):
    return (v + m - 1) // m * m


# ---------------------------------------------------------------------------
# Kernel
# ---------------------------------------------------------------------------
def ae_kernel(x_ref,
              w1t_ref, b1_ref,
              w2_ref, b2_smem,
              w3t_ref, b3_ref,
              w4t_ref, b4_ref,
              out_ref):
    x = x_ref[...]

    # ---- encoder hidden layer: (TB, In_p) @ (In_p, H_p) on the MXU, f32 acc.
    h1 = jnp.dot(x, w1t_ref[...], preferred_element_type=jnp.float32) + b1_ref[...]
    h1 = jnp.maximum(h1, 0.0)

    # ---- encoder output layer (code, width 2): kept off the MXU.
    # c_j = sum_k h1[:, k] * W2[j, k]  -> VPU multiply + cross-lane reduce.
    # b2 lives in SMEM as two scalars.
    w2 = w2_ref[...]                                                  # (2, H_p)
    c0 = jnp.sum(h1 * w2[0:1, :], axis=-1, keepdims=True) + b2_smem[0]
    c1 = jnp.sum(h1 * w2[1:2, :], axis=-1, keepdims=True) + b2_smem[1]
    c0 = jnp.maximum(c0, 0.0)
    c1 = jnp.maximum(c1, 0.0)

    # ---- decoder hidden layer (K = 2): two VPU multiply-adds against rows of W3.T.
    w3t = w3t_ref[...]                                                # (2, H_p)
    h2 = c0 * w3t[0:1, :] + c1 * w3t[1:2, :] + b3_ref[...]            # (TB, H_p)
    h2 = jnp.maximum(h2, 0.0)

    # ---- decoder output layer: (TB, H_p) @ (H_p, In_p) on the MXU, no activation.
    y = jnp.dot(h2.astype(w4t_ref.dtype), w4t_ref[...],
                preferred_element_type=jnp.float32) + b4_ref[...]

    out_ref[...] = y.astype(out_ref.dtype)


# ---------------------------------------------------------------------------
# One-time parameter preparation (pad to lane-dense shapes, transpose, cast)
# ---------------------------------------------------------------------------
def prepare_params(params, *, use_bf16=True):
    """Pad feature dims to multiples of 128, pre-transpose MXU weights, reshape
    biases, and (optionally) cast HBM/MXU-facing tensors to bf16.  Done ONCE."""
    w1, b1 = params["enc_hidden"]   # (H, In), (H,)
    w2, b2 = params["enc_out"]      # (2, H),  (2,)
    w3, b3 = params["dec_hidden"]   # (H, 2),  (2,)
    w4, b4 = params["dec_out"]      # (In, H), (In,)

    n_hidden, in_feat = w1.shape
    in_pad = _round_up(in_feat, 128)
    h_pad = _round_up(n_hidden, 128)

    def pad2(a, r, c):
        return jnp.pad(a, ((0, r - a.shape[0]), (0, c - a.shape[1])))

    def pad_bias(b, n):
        return jnp.pad(b, (0, n - b.shape[0])).reshape(1, n).astype(jnp.float32)

    io_dtype = jnp.bfloat16 if use_bf16 else jnp.float32

    # Zero padding keeps the math exact: padded x/W1 columns contribute 0 to h1,
    # padded h1/h2 columns are relu(0 + 0) = 0, padded output columns are sliced off.
    w1t = pad2(jnp.transpose(w1), in_pad, h_pad).astype(io_dtype)      # (In_p, H_p)
    w2p = pad2(w2, 2, h_pad).astype(jnp.float32)                        # (2, H_p)
    w3t = pad2(jnp.transpose(w3), 2, h_pad).astype(jnp.float32)         # (2, H_p)
    w4t = pad2(jnp.transpose(w4), h_pad, in_pad).astype(io_dtype)       # (H_p, In_p)

    return {
        "w1t": w1t, "b1": pad_bias(b1, h_pad),
        "w2": w2p, "b2": b2.astype(jnp.float32),          # (2,) scalars -> SMEM
        "w3t": w3t, "b3": pad_bias(b3, h_pad),
        "w4t": w4t, "b4": pad_bias(b4, in_pad),
        "in_feat": int(in_feat), "in_pad": int(in_pad), "h_pad": int(h_pad),
        "io_dtype": io_dtype,
    }


# ---------------------------------------------------------------------------
# Forward wrapper
# ---------------------------------------------------------------------------
def ae_1layer_forward(x, prepared, *, block_batch=1024, vmem_limit_bytes=None):
    """x: (batch, input_shape) f32/bf16.  prepared: output of prepare_params."""
    batch, in_feat = x.shape
    assert in_feat == prepared["in_feat"], "feature dim mismatch with prepared params"
    in_pad = prepared["in_pad"]
    io_dtype = prepared["io_dtype"]

    # Per-call: cast + lane-pad the activations only (weights already prepared).
    xp = x.astype(io_dtype)
    if in_pad != in_feat:
        xp = jnp.pad(xp, ((0, 0), (0, in_pad - in_feat)))

    # Batch tiling: full batch when tiny; otherwise aim for >=2 grid steps
    # (so v7x's two TensorCores both get work), capped at block_batch rows.
    if batch <= 8:
        tb = batch
    else:
        half = _round_up(-(-batch // 2), 8)          # ceil(batch/2), 8-sublane aligned
        tb = max(8, min(block_batch, half, batch))
    grid = (pl.cdiv(batch, tb),)

    def const_spec(a):
        nd = a.ndim
        return pl.BlockSpec(a.shape, lambda i, _nd=nd: (0,) * _nd)

    cp_kwargs = dict(dimension_semantics=("parallel",))
    if vmem_limit_bytes is not None:
        cp_kwargs["vmem_limit_bytes"] = vmem_limit_bytes

    out_padded = pl.pallas_call(
        ae_kernel,
        out_shape=jax.ShapeDtypeStruct((batch, in_pad), io_dtype),
        grid=grid,
        in_specs=[
            pl.BlockSpec((tb, in_pad), lambda i: (i, 0)),
            const_spec(prepared["w1t"]), const_spec(prepared["b1"]),
            const_spec(prepared["w2"]),
            pl.BlockSpec(memory_space=pltpu.MemorySpace.SMEM),     # b2 scalars
            const_spec(prepared["w3t"]), const_spec(prepared["b3"]),
            const_spec(prepared["w4t"]), const_spec(prepared["b4"]),
        ],
        out_specs=pl.BlockSpec((tb, in_pad), lambda i: (i, 0)),
        compiler_params=pltpu.CompilerParams(**cp_kwargs),
    )(xp,
      prepared["w1t"], prepared["b1"],
      prepared["w2"], prepared["b2"],
      prepared["w3t"], prepared["b3"],
      prepared["w4t"], prepared["b4"])

    return out_padded[:, :in_feat]


# ---------------------------------------------------------------------------
# Init & reference
# ---------------------------------------------------------------------------
def init_params(key, input_shape, n_hidden):
    """Deterministic init mimicking nn.Linear shapes: W is (out, in), b is (out,)."""
    def linear(key, out_f, in_f):
        kw, kb = jax.random.split(key)
        bound = 1.0 / jnp.sqrt(in_f)
        w = jax.random.uniform(kw, (out_f, in_f), jnp.float32, -bound, bound)
        b = jax.random.uniform(kb, (out_f,), jnp.float32, -bound, bound)
        return w, b

    k1, k2, k3, k4 = jax.random.split(key, 4)
    return {
        "enc_hidden": linear(k1, n_hidden, input_shape),
        "enc_out":    linear(k2, 2, n_hidden),
        "dec_hidden": linear(k3, n_hidden, 2),
        "dec_out":    linear(k4, input_shape, n_hidden),
    }


def ae_1layer_reference(x, params):
    """Pure-JAX f32 reference for correctness checking."""
    w1, b1 = params["enc_hidden"]
    w2, b2 = params["enc_out"]
    w3, b3 = params["dec_hidden"]
    w4, b4 = params["dec_out"]
    h1 = jax.nn.relu(x @ w1.T + b1)
    c = jax.nn.relu(h1 @ w2.T + b2)
    h2 = jax.nn.relu(c @ w3.T + b3)
    return h2 @ w4.T + b4


if __name__ == "__main__":
    key = jax.random.PRNGKey(0)
    k_params, k_x = jax.random.split(key)

    batch = 8
    input_shape = 16
    n_hidden = 32

    params = init_params(k_params, input_shape, n_hidden)
    x = jax.random.normal(k_x, (batch, input_shape), dtype=jnp.float32)
    ref = ae_1layer_reference(x, params)

    # Exact f32 path (tight tolerance).
    prep_f32 = prepare_params(params, use_bf16=False)
    out_f32 = jax.block_until_ready(ae_1layer_forward(x, prep_f32))
    assert out_f32.shape == (batch, input_shape)
    assert jnp.allclose(out_f32, ref, atol=1e-5, rtol=1e-5), "f32 path mismatch vs reference"

    # Default bf16 I/O path (f32 accumulation; loose tolerance vs f32 reference).
    prep_bf16 = prepare_params(params, use_bf16=True)
    out_bf16 = jax.block_until_ready(ae_1layer_forward(x, prep_bf16))
    assert out_bf16.shape == (batch, input_shape)
    assert jnp.allclose(out_bf16.astype(jnp.float32), ref, atol=1e-1, rtol=1e-1), \
        "bf16 path mismatch vs reference"

    print("KERNEL_OK")
</pallas_src>

<mosaic_0001>
module attributes {stable_mosaic.version = 11 : i64} {
  func.func @ae_kernel(%arg0: i32, %arg1: memref<8x128xf32, #tpu.memory_space<vmem>>, %arg2: memref<128x128xf32, #tpu.memory_space<vmem>>, %arg3: memref<1x128xf32, #tpu.memory_space<vmem>>, %arg4: memref<2x128xf32, #tpu.memory_space<vmem>>, %arg5: memref<2xf32, #tpu.memory_space<smem>>, %arg6: memref<2x128xf32, #tpu.memory_space<vmem>>, %arg7: memref<1x128xf32, #tpu.memory_space<vmem>>, %arg8: memref<128x128xf32, #tpu.memory_space<vmem>>, %arg9: memref<1x128xf32, #tpu.memory_space<vmem>>, %arg10: memref<8x128xf32, #tpu.memory_space<vmem>>) attributes {dimension_semantics = [#tpu.dimension_semantics<parallel>], iteration_bounds = array<i64: 1>, scalar_prefetch = 0 : i64, scratch_operands = 0 : i64, tpu.core_type = #tpu.core_type<tc>, window_params = [{transform_indices = @transform_0, window_bounds = array<i64: 8, 128>}, {pipeline_mode = #tpu.pipeline_mode<synchronous>, transform_indices = @transform_1, window_bounds = array<i64: 128, 128>}, {pipeline_mode = #tpu.pipeline_mode<synchronous>, transform_indices = @transform_2, window_bounds = array<i64: 1, 128>}, {pipeline_mode = #tpu.pipeline_mode<synchronous>, transform_indices = @transform_3, window_bounds = array<i64: 2, 128>}, {transform_indices = @transform_4, window_bounds = array<i64: 2>}, {pipeline_mode = #tpu.pipeline_mode<synchronous>, transform_indices = @transform_5, window_bounds = array<i64: 2, 128>}, {pipeline_mode = #tpu.pipeline_mode<synchronous>, transform_indices = @transform_6, window_bounds = array<i64: 1, 128>}, {pipeline_mode = #tpu.pipeline_mode<synchronous>, transform_indices = @transform_7, window_bounds = array<i64: 128, 128>}, {pipeline_mode = #tpu.pipeline_mode<synchronous>, transform_indices = @transform_8, window_bounds = array<i64: 1, 128>}, {transform_indices = @transform_9, window_bounds = array<i64: 8, 128>}]} {
    %c0 = arith.constant 0 : index
    %c0_0 = arith.constant 0 : index
    %0 = vector.load %arg1[%c0, %c0_0] : memref<8x128xf32, #tpu.memory_space<vmem>>, vector<8x128xf32>
    %c0_1 = arith.constant 0 : index
    %c0_2 = arith.constant 0 : index
    %1 = vector.load %arg2[%c0_1, %c0_2] : memref<128x128xf32, #tpu.memory_space<vmem>>, vector<128x128xf32>
    %cst = arith.constant dense<0.000000e+00> : vector<8x128xf32>
    %2 = tpu.matmul %0, %1, %cst {dimension_numbers = #tpu.dot_dimension_numbers<[1], [0], [0], [1], [0, 0, 1, 1], [], []>} : vector<8x128xf32>, vector<128x128xf32>, vector<8x128xf32> -> vector<8x128xf32>
    %c0_3 = arith.constant 0 : index
    %c0_4 = arith.constant 0 : index
    %3 = vector.load %arg3[%c0_3, %c0_4] : memref<1x128xf32, #tpu.memory_space<vmem>>, vector<1x128xf32>
    %4 = vector.broadcast %3 : vector<1x128xf32> to vector<8x128xf32>
    %5 = arith.addf %2, %4 : vector<8x128xf32>
    %cst_5 = arith.constant 0.000000e+00 : f32
    %6 = vector.broadcast %cst_5 : f32 to vector<8x128xf32>
    %7 = arith.maximumf %5, %6 : vector<8x128xf32>
    %c0_6 = arith.constant 0 : index
    %c0_7 = arith.constant 0 : index
    %8 = vector.load %arg4[%c0_6, %c0_7] : memref<2x128xf32, #tpu.memory_space<vmem>>, vector<2x128xf32>
    %9 = vector.extract_strided_slice %8 {offsets = [0, 0], sizes = [1, 128], strides = [1, 1]} : vector<2x128xf32> to vector<1x128xf32>
    %10 = vector.broadcast %9 : vector<1x128xf32> to vector<8x128xf32>
    %11 = arith.mulf %7, %10 : vector<8x128xf32>
    %cst_8 = arith.constant dense<0.000000e+00> : vector<8xf32>
    %12 = vector.multi_reduction <add>, %11, %cst_8 [1] : vector<8x128xf32> to vector<8xf32>
    %13 = vector.shape_cast %12 : vector<8xf32> to vector<8x1xf32>
    %c0_9 = arith.constant 0 : index
    %14 = memref.load %arg5[%c0_9] : memref<2xf32, #tpu.memory_space<smem>>
    %15 = vector.broadcast %14 : f32 to vector<8x1xf32>
    %16 = arith.addf %13, %15 : vector<8x1xf32>
    %17 = vector.extract_strided_slice %8 {offsets = [1, 0], sizes = [1, 128], strides = [1, 1]} : vector<2x128xf32> to vector<1x128xf32>
    %18 = vector.broadcast %17 : vector<1x128xf32> to vector<8x128xf32>
    %19 = arith.mulf %7, %18 : vector<8x128xf32>
    %cst_10 = arith.constant dense<0.000000e+00> : vector<8xf32>
    %20 = vector.multi_reduction <add>, %19, %cst_10 [1] : vector<8x128xf32> to vector<8xf32>
    %21 = vector.shape_cast %20 : vector<8xf32> to vector<8x1xf32>
    %c1 = arith.constant 1 : index
    %22 = memref.load %arg5[%c1] : memref<2xf32, #tpu.memory_space<smem>>
    %23 = vector.broadcast %22 : f32 to vector<8x1xf32>
    %24 = arith.addf %21, %23 : vector<8x1xf32>
    %cst_11 = arith.constant 0.000000e+00 : f32
    %25 = vector.broadcast %cst_11 : f32 to vector<8x1xf32>
    %26 = arith.maximumf %16, %25 : vector<8x1xf32>
    %cst_12 = arith.constant 0.000000e+00 : f32
    %27 = vector.broadcast %cst_12 : f32 to vector<8x1xf32>
    %28 = arith.maximumf %24, %27 : vector<8x1xf32>
    %c0_13 = arith.constant 0 : index
    %c0_14 = arith.constant 0 : index
    %29 = vector.load %arg6[%c0_13, %c0_14] : memref<2x128xf32, #tpu.memory_space<vmem>>, vector<2x128xf32>
    %30 = vector.extract_strided_slice %29 {offsets = [0, 0], sizes = [1, 128], strides = [1, 1]} : vector<2x128xf32> to vector<1x128xf32>
    %31 = vector.broadcast %26 : vector<8x1xf32> to vector<8x128xf32>
    %32 = vector.broadcast %30 : vector<1x128xf32> to vector<8x128xf32>
    %33 = arith.mulf %31, %32 : vector<8x128xf32>
    %34 = vector.extract_strided_slice %29 {offsets = [1, 0], sizes = [1, 128], strides = [1, 1]} : vector<2x128xf32> to vector<1x128xf32>
    %35 = vector.broadcast %28 : vector<8x1xf32> to vector<8x128xf32>
    %36 = vector.broadcast %34 : vector<1x128xf32> to vector<8x128xf32>
    %37 = arith.mulf %35, %36 : vector<8x128xf32>
    %38 = arith.addf %33, %37 : vector<8x128xf32>
    %c0_15 = arith.constant 0 : index
    %c0_16 = arith.constant 0 : index
    %39 = vector.load %arg7[%c0_15, %c0_16] : memref<1x128xf32, #tpu.memory_space<vmem>>, vector<1x128xf32>
    %40 = vector.broadcast %39 : vector<1x128xf32> to vector<8x128xf32>
    %41 = arith.addf %38, %40 : vector<8x128xf32>
    %cst_17 = arith.constant 0.000000e+00 : f32
    %42 = vector.broadcast %cst_17 : f32 to vector<8x128xf32>
    %43 = arith.maximumf %41, %42 : vector<8x128xf32>
    %c0_18 = arith.constant 0 : index
    %c0_19 = arith.constant 0 : index
    %44 = vector.load %arg8[%c0_18, %c0_19] : memref<128x128xf32, #tpu.memory_space<vmem>>, vector<128x128xf32>
    %cst_20 = arith.constant dense<0.000000e+00> : vector<8x128xf32>
    %45 = tpu.matmul %43, %44, %cst_20 {dimension_numbers = #tpu.dot_dimension_numbers<[1], [0], [0], [1], [0, 0, 1, 1], [], []>} : vector<8x128xf32>, vector<128x128xf32>, vector<8x128xf32> -> vector<8x128xf32>
    %c0_21 = arith.constant 0 : index
    %c0_22 = arith.constant 0 : index
    %46 = vector.load %arg9[%c0_21, %c0_22] : memref<1x128xf32, #tpu.memory_space<vmem>>, vector<1x128xf32>
    %47 = vector.broadcast %46 : vector<1x128xf32> to vector<8x128xf32>
    %48 = arith.addf %45, %47 : vector<8x128xf32>
    %c0_23 = arith.constant 0 : index
    %c0_24 = arith.constant 0 : index
    %49 = vector.load %arg10[%c0_23, %c0_24] : memref<8x128xf32, #tpu.memory_space<vmem>>, vector<8x128xf32>
    tpu.vector_store %arg10[%c0_23, %c0_24], %48 {strides = array<i32>} : memref<8x128xf32, #tpu.memory_space<vmem>>, vector<8x128xf32>,
    return
  }
  func.func @transform_0(%arg0: i32) -> (i32, i32) {
    %c0_i32 = arith.constant 0 : i32
    %c0_i32_0 = arith.constant 0 : i32
    return %arg0, %c0_i32 : i32, i32
  }
  func.func @transform_1(%arg0: i32) -> (i32, i32) {
    %c0_i32 = arith.constant 0 : i32
    %c0_i32_0 = arith.constant 0 : i32
    %c0_i32_1 = arith.constant 0 : i32
    return %c0_i32, %c0_i32_0 : i32, i32
  }
  func.func @transform_2(%arg0: i32) -> (i32, i32) {
    %c0_i32 = arith.constant 0 : i32
    %c0_i32_0 = arith.constant 0 : i32
    %c0_i32_1 = arith.constant 0 : i32
    return %c0_i32, %c0_i32_0 : i32, i32
  }
  func.func @transform_3(%arg0: i32) -> (i32, i32) {
    %c0_i32 = arith.constant 0 : i32
    %c0_i32_0 = arith.constant 0 : i32
    %c0_i32_1 = arith.constant 0 : i32
    return %c0_i32, %c0_i32_0 : i32, i32
  }
  func.func @transform_4(%arg0: i32) -> i32 {
    %c0_i32 = arith.constant 0 : i32
    %c0_i32_0 = arith.constant 0 : i32
    return %c0_i32 : i32
  }
  func.func @transform_5(%arg0: i32) -> (i32, i32) {
    %c0_i32 = arith.constant 0 : i32
    %c0_i32_0 = arith.constant 0 : i32
    %c0_i32_1 = arith.constant 0 : i32
    return %c0_i32, %c0_i32_0 : i32, i32
  }
  func.func @transform_6(%arg0: i32) -> (i32, i32) {
    %c0_i32 = arith.constant 0 : i32
    %c0_i32_0 = arith.constant 0 : i32
    %c0_i32_1 = arith.constant 0 : i32
    return %c0_i32, %c0_i32_0 : i32, i32
  }
  func.func @transform_7(%arg0: i32) -> (i32, i32) {
    %c0_i32 = arith.constant 0 : i32
    %c0_i32_0 = arith.constant 0 : i32
    %c0_i32_1 = arith.constant 0 : i32
    return %c0_i32, %c0_i32_0 : i32, i32
  }
  func.func @transform_8(%arg0: i32) -> (i32, i32) {
    %c0_i32 = arith.constant 0 : i32
    %c0_i32_0 = arith.constant 0 : i32
    %c0_i32_1 = arith.constant 0 : i32
    return %c0_i32, %c0_i32_0 : i32, i32
  }
  func.func @transform_9(%arg0: i32) -> (i32, i32) {
    %c0_i32 = arith.constant 0 : i32
    %c0_i32_0 = arith.constant 0 : i32
    return %arg0, %c0_i32 : i32, i32
  }
}

</mosaic_0001>

<llo_original>
// kernel: tpu_custom_call.1
$region0: #{tpu_custom_call.1}
  #allocation0 [shape = 'u32[]', space=smem, size = 0x4, offset = 0x4, fixed_abs, tag = 'smem constant byte address 0x4 - core index']
  #allocation1 [shape = 'u32[144,128]{1,0:T(1,128)}', space=vmem, size = 0x12000, scoped, tag = 'internal scratch']
  %s0 = inlined_call_operand.hbm [shape: f32[8,128], index: 0, kind: input, shape index: {}]
  %s1 = inlined_call_operand.hbm [shape: f32[128,128], index: 1, kind: input, shape index: {}]
  %s2 = inlined_call_operand.vmem [shape: f32[1,128], index: 2, kind: input, shape index: {}]
  %s3 = inlined_call_operand.vmem [shape: f32[2,128], index: 3, kind: input, shape index: {}]
  %s4 = inlined_call_operand.vmem [shape: f32[2], index: 4, kind: input, shape index: {}]
  %s5 = inlined_call_operand.vmem [shape: f32[2,128], index: 5, kind: input, shape index: {}]
  %s6 = inlined_call_operand.vmem [shape: f32[1,128], index: 6, kind: input, shape index: {}]
  %s7 = inlined_call_operand.hbm [shape: f32[128,128], index: 7, kind: input, shape index: {}]
  %s8 = inlined_call_operand.vmem [shape: f32[1,128], index: 8, kind: input, shape index: {}]
  %s9 = inlined_call_operand.hbm [shape: f32[8,128], index: 9, kind: output, shape index: {}]
  %s10 = sld [smem:[#allocation0]]
  $region62: #{tpu_custom_call.1} parent=0
    _
  %s12 = ssub.s32 1, %s10
  %s13 = scalar_select 0, %s12, %s10
  $region1: #{tpu_custom_call.1} parent=0
    #allocation2 [shape = 'u8[4096]{0}', space=vmem, size = 0x1000, scoped, tag = 'input window, operand 0, single buffered']
    #allocation3 [shape = 's32[1]{0}', space=sflag, size = 0x4, scoped, tag = 'scoped memory for tpu_custom_call.1']
    #allocation4 [shape = 's32[1]{0}', space=sflag, size = 0x4, scoped, tag = 'scoped memory for tpu_custom_call.1']
    #allocation5 [shape = 's32[1]{0}', space=sflag, size = 0x4, scoped, tag = 'scoped memory for tpu_custom_call.1']
    #allocation6 [shape = 'u8[65536]{0}', space=vmem, size = 0x10000, scoped, tag = 'input window, operand 1, single buffered']
    #allocation7 [shape = 's32[1]{0}', space=sflag, size = 0x4, scoped, tag = 'scoped memory for tpu_custom_call.1']
    #allocation8 [shape = 'u8[512]{0}', space=smem, size = 0x200, scoped, tag = 'input window, operand 4, single buffered']
    #allocation9 [shape = 'u8[65536]{0}', space=vmem, size = 0x10000, scoped, tag = 'input window, operand 7, single buffered']
    #allocation10 [shape = 'u8[4096]{0}', space=vmem, size = 0x1000, scoped, tag = 'output window, operand 0, single buffered']
    %14 = vsyncpa [#allocation3], 0
    %15 = vsyncpa [#allocation7], 0
    %16 = vsyncpa [#allocation5], 0
    %17 = vsyncpa [#allocation4], 0
    // Predicated region
    $region2: #{tpu_custom_call.1} parent=1 // pred_check
      _
    $region3: #{tpu_custom_call.1} parent=1 // pred_check_branch
      %19 = sbr.rel (0) target = $region5
    $region4: #{tpu_custom_call.1} parent=1 // pred_region
      %s21 = ssub.s32 128, 128
      %22 = vsyncadd [#allocation3], %s21
      %s24 = sshll.u32 [#allocation2], 4
      %s25 = int_to_ptr.vmem [resolvable:$true] %s24
      %27 = dma.hbm_to_vmem [thread:$0]  %s0, 128, %s25, [#allocation3]
    $region5: #{tpu_custom_call.1} parent=1 // pred_fallthru
      _
    // Predicated region
    $region6: #{tpu_custom_call.1} parent=1 // pred_check
      _
    $region7: #{tpu_custom_call.1} parent=1 // pred_check_branch
      %29 = sbr.rel (0) target = $region9
    $region8: #{tpu_custom_call.1} parent=1 // pred_region
      %s31 = ssub.s32 2048, 2048
      %32 = vsyncadd [#allocation7], %s31
      %s33 = sshll.u32 [#allocation6], 4
      %s34 = int_to_ptr.vmem [resolvable:$true] %s33
      %39 = dma.hbm_to_vmem [thread:$0]  %s1, 2048, %s34, [#allocation7], 128, 128, 8
    $region9: #{tpu_custom_call.1} parent=1 // pred_fallthru
      _
    // Predicated region
    $region10: #{tpu_custom_call.1} parent=1 // pred_check
      _
    $region11: #{tpu_custom_call.1} parent=1 // pred_check_branch
      %41 = sbr.rel (0) target = $region13
    $region12: #{tpu_custom_call.1} parent=1 // pred_region
      _
    $region13: #{tpu_custom_call.1} parent=1 // pred_fallthru
      _
    // Predicated region
    $region14: #{tpu_custom_call.1} parent=1 // pred_check
      _
    $region15: #{tpu_custom_call.1} parent=1 // pred_check_branch
      %43 = sbr.rel (0) target = $region17
    $region16: #{tpu_custom_call.1} parent=1 // pred_region
      _
    $region17: #{tpu_custom_call.1} parent=1 // pred_fallthru
      _
    // Predicated region
    $region18: #{tpu_custom_call.1} parent=1 // pred_check
      _
    $region19: #{tpu_custom_call.1} parent=1 // pred_check_branch
      %45 = sbr.rel (0) target = $region21
    $region20: #{tpu_custom_call.1} parent=1 // pred_region
      %s47 = ssub.s32 16, 16
      %48 = vsyncadd [#allocation5], %s47
      %s50 = sshll.u32 %s4, 4
      %s51 = int_to_ptr.vmem [resolvable:$true] %s50
      %53 = dma.vmem_to_smem %s51, 16, [#allocation8], [#allocation5]
    $region21: #{tpu_custom_call.1} parent=1 // pred_fallthru
      _
    // Predicated region
    $region22: #{tpu_custom_call.1} parent=1 // pred_check
      _
    $region23: #{tpu_custom_call.1} parent=1 // pred_check_branch
      %55 = sbr.rel (0) target = $region25
    $region24: #{tpu_custom_call.1} parent=1 // pred_region
      _
    $region25: #{tpu_custom_call.1} parent=1 // pred_fallthru
      _
    // Predicated region
    $region26: #{tpu_custom_call.1} parent=1 // pred_check
      _
    $region27: #{tpu_custom_call.1} parent=1 // pred_check_branch
      %57 = sbr.rel (0) target = $region29
    $region28: #{tpu_custom_call.1} parent=1 // pred_region
      _
    $region29: #{tpu_custom_call.1} parent=1 // pred_fallthru
      _
    // Predicated region
    $region30: #{tpu_custom_call.1} parent=1 // pred_check
      _
    $region31: #{tpu_custom_call.1} parent=1 // pred_check_branch
      %59 = sbr.rel (0) target = $region33
    $region32: #{tpu_custom_call.1} parent=1 // pred_region
      %s61 = ssub.s32 2048, 2048
      %62 = vsyncadd [#allocation7], %s61
      %s63 = sshll.u32 [#allocation9], 4
      %s64 = int_to_ptr.vmem [resolvable:$true] %s63
      %69 = dma.hbm_to_vmem [thread:$0]  %s7, 2048, %s64, [#allocation7], 128, 128, 8
    $region33: #{tpu_custom_call.1} parent=1 // pred_fallthru
      _
    // Predicated region
    $region34: #{tpu_custom_call.1} parent=1 // pred_check
      _
    $region35: #{tpu_custom_call.1} parent=1 // pred_check_branch
      %71 = sbr.rel (0) target = $region37
    $region36: #{tpu_custom_call.1} parent=1 // pred_region
      _
    $region37: #{tpu_custom_call.1} parent=1 // pred_fallthru
      _
    // Predicated region
    $region38: #{tpu_custom_call.1} parent=1 // pred_check
      _
    $region39: #{tpu_custom_call.1} parent=1 // pred_check_branch
      %73 = sbr.rel (0) target = $region41
    $region40: #{tpu_custom_call.1} parent=1 // pred_region
      %74 = dma.done [#allocation3], 128
    $region41: #{tpu_custom_call.1} parent=1 // pred_fallthru
      _
    // Predicated region
    $region42: #{tpu_custom_call.1} parent=1 // pred_check
      _
    $region43: #{tpu_custom_call.1} parent=1 // pred_check_branch
      %76 = sbr.rel (0) target = $region45
    $region44: #{tpu_custom_call.1} parent=1 // pred_region
      %77 = dma.done [#allocation7], 2048
    $region45: #{tpu_custom_call.1} parent=1 // pred_fallthru
      _
    // Predicated region
    $region46: #{tpu_custom_call.1} parent=1 // pred_check
      _
    $region47: #{tpu_custom_call.1} parent=1 // pred_check_branch
      %79 = sbr.rel (0) target = $region49
    $region48: #{tpu_custom_call.1} parent=1 // pred_region
      %80 = dma.done [#allocation5], 16
    $region49: #{tpu_custom_call.1} parent=1 // pred_fallthru
      _
    // Predicated region
    $region50: #{tpu_custom_call.1} parent=1 // pred_check
      _
    $region51: #{tpu_custom_call.1} parent=1 // pred_check_branch
      %82 = sbr.rel (0) target = $region53
    $region52: #{tpu_custom_call.1} parent=1 // pred_region
      %83 = dma.done [#allocation7], 2048
    $region53: #{tpu_custom_call.1} parent=1 // pred_fallthru
      _
    %84 = sfence
    %v85 = vld [vmem:[#allocation2] sm:$0xff]
    %v86 = vld [vmem:[#allocation6] sm:$0xff]
    %v87 = vld [vmem:[#allocation6 + $0x8] sm:$0xff]
    %v88 = vld [vmem:[#allocation6 + $0x10] sm:$0xff]
    %v89 = vld [vmem:[#allocation6 + $0x18] sm:$0xff]
    %v90 = vld [vmem:[#allocation6 + $0x20] sm:$0xff]
    %v91 = vld [vmem:[#allocation6 + $0x28] sm:$0xff]
    %v92 = vld [vmem:[#allocation6 + $0x30] sm:$0xff]
    %v93 = vld [vmem:[#allocation6 + $0x38] sm:$0xff]
    %v94 = vld [vmem:[#allocation6 + $0x40] sm:$0xff]
    %v95 = vld [vmem:[#allocation6 + $0x48] sm:$0xff]
    %v96 = vld [vmem:[#allocation6 + $0x50] sm:$0xff]
    %v97 = vld [vmem:[#allocation6 + $0x58] sm:$0xff]
    %v98 = vld [vmem:[#allocation6 + $0x60] sm:$0xff]
    %v99 = vld [vmem:[#allocation6 + $0x68] sm:$0xff]
    %v100 = vld [vmem:[#allocation6 + $0x70] sm:$0xff]
    %v101 = vld [vmem:[#allocation6 + $0x78] sm:$0xff]
    %v102 = vld [vmem:[%s2] sm:$0x1]
    %v104 = vlaneseq
    %v105 = vshrl.u32 %v104, 7
    %v106 = vsub.s32 0, %v105
    %v107 = vrot.slane %v102, %v106
    %109 = vmatprep.subr.mxu0 0.0
    %110 = vmatpush1.msra.mxu0 %v86
    %111 = vmatprep.subr.mxu0 0.0
    %112 = vmatpush1.msra.mxu0 %v87
    %113 = vmatprep.subr.mxu0 0.0
    %114 = vmatpush1.msra.mxu0 %v88
    %115 = vmatprep.subr.mxu0 0.0
    %116 = vmatpush1.msra.mxu0 %v89
    %117 = vmatprep.subr.mxu0 0.0
    %118 = vmatpush1.msra.mxu0 %v90
    %119 = vmatprep.subr.mxu0 0.0
    %120 = vmatpush1.msra.mxu0 %v91
    %121 = vmatprep.subr.mxu0 0.0
    %122 = vmatpush1.msra.mxu0 %v92
    %123 = vmatprep.subr.mxu0 0.0
    %124 = vmatpush1.msra.mxu0 %v93
    %125 = vmatprep.subr.mxu0 0.0
    %126 = vmatpush1.msra.mxu0 %v94
    %127 = vmatprep.subr.mxu0 0.0
    %128 = vmatpush1.msra.mxu0 %v95
    %129 = vmatprep.subr.mxu0 0.0
    %130 = vmatpush1.msra.mxu0 %v96
    %131 = vmatprep.subr.mxu0 0.0
    %132 = vmatpush1.msra.mxu0 %v97
    %133 = vmatprep.subr.mxu0 0.0
    %134 = vmatpush1.msra.mxu0 %v98
    %135 = vmatprep.subr.mxu0 0.0
    %136 = vmatpush1.msra.mxu0 %v99
    %137 = vmatprep.subr.mxu0 0.0
    %138 = vmatpush1.msra.mxu0 %v100
    %139 = vmatprep.subr.mxu0 0.0
    %140 = vmatpush1.msra.mxu0 %v101
    %141 = vmatprep.subr.mxu0 0.0
    %142 = vmatpush1.msra.mxu0 0.0
    %143 = vmatprep.subr.mxu0 0.0
    %144 = vmatpush1.msra.mxu0 0.0
    %145 = vmatprep.subr.mxu0 0.0
    %146 = vmatpush1.msra.mxu0 0.0
    %147 = vmatprep.subr.mxu0 0.0
    %148 = vmatpush1.msra.mxu0 0.0
    %149 = vmatprep.subr.mxu0 0.0
    %150 = vmatpush1.msra.mxu0 0.0
    %151 = vmatprep.subr.mxu0 0.0
    %152 = vmatpush1.msra.mxu0 0.0
    %153 = vmatprep.subr.mxu0 0.0
    %154 = vmatpush1.msra.mxu0 0.0
    %155 = vmatprep.subr.mxu0 0.0
    %156 = vmatpush1.msra.mxu0 0.0
    %157 = vmatprep.subr.mxu0 0.0
    %158 = vmatpush1.msra.mxu0 0.0
    %159 = vmatprep.subr.mxu0 0.0
    %160 = vmatpush1.msra.mxu0 0.0
    %161 = vmatprep.subr.mxu0 0.0
    %162 = vmatpush1.msra.mxu0 0.0
    %163 = vmatprep.subr.mxu0 0.0
    %164 = vmatpush1.msra.mxu0 0.0
    %165 = vmatprep.subr.mxu0 0.0
    %166 = vmatpush1.msra.mxu0 0.0
    %167 = vmatprep.subr.mxu0 0.0
    %168 = vmatpush1.msra.mxu0 0.0
    %169 = vmatprep.subr.mxu0 0.0
    %170 = vmatpush1.msra.mxu0 0.0
    %171 = vmatprep.subr.mxu0 0.0
    %172 = vmatpush1.msra.mxu0 0.0
    %173 = vmatprep.mubr.f32.mxu0 0.0
    %174 = vmatmul.mubr.f32.gmra.mrb[0].mxu0 %v85
    %v175 = vpop.f32.mrb[0].mxu0
    %v176 = vadd.f32 %v107, %v175
    %v177 = vpop.f32.mrb[0].mxu0
    %178 = vdwg.mxu0
    %v179 = vmax.f32 %v176, 0.0
    %v180 = vld [vmem:[%s3] sm:$0x3]
    %v181 = vlaneseq
    %v182 = vshrl.u32 %v181, 7
    %v183 = vsub.s32 0, %v182
    %v184 = vrot.slane %v180, %v183
    %v185 = vmul.f32 %v179, %v184
    %186 = vadd.xlane.f32.xlu0 %v185
    %v187 = vpop.xlane.xlu0 %186
    %s188 = sld [smem:[#allocation8]]
    %v189 = vstv %s188
    %v190 = vadd.f32 %v187, %v189
    %v191 = vlaneseq
    %v192 = vshrl.u32 %v191, 7
    %v193 = vsub.s32 1, %v192
    %v194 = vrot.slane %v180, %v193
    %v195 = vmul.f32 %v179, %v194
    %196 = vadd.xlane.f32.xlu0 %v195
    %v197 = vpop.xlane.xlu0 %196
    %s198 = sld [smem:[#allocation8 + $0x1]]
    %v199 = vstv %s198
    %v200 = vadd.f32 %v197, %v199
    %v201 = vmax.f32 %v190, 0.0
    %v202 = vmax.f32 %v200, 0.0
    %v203 = vld [vmem:[%s5] sm:$0x3]
    %v204 = vlaneseq
    %v205 = vshrl.u32 %v204, 7
    %v206 = vsub.s32 0, %v205
    %v207 = vrot.slane %v203, %v206
    %v208 = vmul.f32 %v201, %v207
    %v209 = vlaneseq
    %v210 = vshrl.u32 %v209, 7
    %v211 = vsub.s32 1, %v210
    %v212 = vrot.slane %v203, %v211
    %v213 = vmul.f32 %v202, %v212
    %v214 = vadd.f32 %v208, %v213
    %v215 = vld [vmem:[%s6] sm:$0x1]
    %v217 = vlaneseq
    %v218 = vshrl.u32 %v217, 7
    %v219 = vsub.s32 0, %v218
    %v220 = vrot.slane %v215, %v219
    %v222 = vadd.f32 %v214, %v220
    %v223 = vmax.f32 %v222, 0.0
    %v224 = vld [vmem:[#allocation9] sm:$0xff]
    %v225 = vld [vmem:[#allocation9 + $0x8] sm:$0xff]
    %v226 = vld [vmem:[#allocation9 + $0x10] sm:$0xff]
    %v227 = vld [vmem:[#allocation9 + $0x18] sm:$0xff]
    %v228 = vld [vmem:[#allocation9 + $0x20] sm:$0xff]
    %v229 = vld [vmem:[#allocation9 + $0x28] sm:$0xff]
    %v230 = vld [vmem:[#allocation9 + $0x30] sm:$0xff]
    %v231 = vld [vmem:[#allocation9 + $0x38] sm:$0xff]
    %v232 = vld [vmem:[#allocation9 + $0x40] sm:$0xff]
    %v233 = vld [vmem:[#allocation9 + $0x48] sm:$0xff]
    %v234 = vld [vmem:[#allocation9 + $0x50] sm:$0xff]
    %v235 = vld [vmem:[#allocation9 + $0x58] sm:$0xff]
    %v236 = vld [vmem:[#allocation9 + $0x60] sm:$0xff]
    %v237 = vld [vmem:[#allocation9 + $0x68] sm:$0xff]
    %v238 = vld [vmem:[#allocation9 + $0x70] sm:$0xff]
    %v239 = vld [vmem:[#allocation9 + $0x78] sm:$0xff]
    %v240 = vld [vmem:[%s8] sm:$0x1]
    %v242 = vlaneseq
    %v243 = vshrl.u32 %v242, 7
    %v244 = vsub.s32 0, %v243
    %v245 = vrot.slane %v240, %v244
    %247 = vmatprep.subr.mxu0 0.0
    %248 = vmatpush1.msra.mxu0 %v224
    %249 = vmatprep.subr.mxu0 0.0
    %250 = vmatpush1.msra.mxu0 %v225
    %251 = vmatprep.subr.mxu0 0.0
    %252 = vmatpush1.msra.mxu0 %v226
    %253 = vmatprep.subr.mxu0 0.0
    %254 = vmatpush1.msra.mxu0 %v227
    %255 = vmatprep.subr.mxu0 0.0
    %256 = vmatpush1.msra.mxu0 %v228
    %257 = vmatprep.subr.mxu0 0.0
    %258 = vmatpush1.msra.mxu0 %v229
    %259 = vmatprep.subr.mxu0 0.0
    %260 = vmatpush1.msra.mxu0 %v230
    %261 = vmatprep.subr.mxu0 0.0
    %262 = vmatpush1.msra.mxu0 %v231
    %263 = vmatprep.subr.mxu0 0.0
    %264 = vmatpush1.msra.mxu0 %v232
    %265 = vmatprep.subr.mxu0 0.0
    %266 = vmatpush1.msra.mxu0 %v233
    %267 = vmatprep.subr.mxu0 0.0
    %268 = vmatpush1.msra.mxu0 %v234
    %269 = vmatprep.subr.mxu0 0.0
    %270 = vmatpush1.msra.mxu0 %v235
    %271 = vmatprep.subr.mxu0 0.0
    %272 = vmatpush1.msra.mxu0 %v236
    %273 = vmatprep.subr.mxu0 0.0
    %274 = vmatpush1.msra.mxu0 %v237
    %275 = vmatprep.subr.mxu0 0.0
    %276 = vmatpush1.msra.mxu0 %v238
    %277 = vmatprep.subr.mxu0 0.0
    %278 = vmatpush1.msra.mxu0 %v239
    %279 = vmatprep.subr.mxu0 0.0
    %280 = vmatpush1.msra.mxu0 0.0
    %281 = vmatprep.subr.mxu0 0.0
    %282 = vmatpush1.msra.mxu0 0.0
    %283 = vmatprep.subr.mxu0 0.0
    %284 = vmatpush1.msra.mxu0 0.0
    %285 = vmatprep.subr.mxu0 0.0
    %286 = vmatpush1.msra.mxu0 0.0
    %287 = vmatprep.subr.mxu0 0.0
    %288 = vmatpush1.msra.mxu0 0.0
    %289 = vmatprep.subr.mxu0 0.0
    %290 = vmatpush1.msra.mxu0 0.0
    %291 = vmatprep.subr.mxu0 0.0
    %292 = vmatpush1.msra.mxu0 0.0
    %293 = vmatprep.subr.mxu0 0.0
    %294 = vmatpush1.msra.mxu0 0.0
    %295 = vmatprep.subr.mxu0 0.0
    %296 = vmatpush1.msra.mxu0 0.0
    %297 = vmatprep.subr.mxu0 0.0
    %298 = vmatpush1.msra.mxu0 0.0
    %299 = vmatprep.subr.mxu0 0.0
    %300 = vmatpush1.msra.mxu0 0.0
    %301 = vmatprep.subr.mxu0 0.0
    %302 = vmatpush1.msra.mxu0 0.0
    %303 = vmatprep.subr.mxu0 0.0
    %304 = vmatpush1.msra.mxu0 0.0
    %305 = vmatprep.subr.mxu0 0.0
    %306 = vmatpush1.msra.mxu0 0.0
    %307 = vmatprep.subr.mxu0 0.0
    %308 = vmatpush1.msra.mxu0 0.0
    %309 = vmatprep.subr.mxu0 0.0
    %310 = vmatpush1.msra.mxu0 0.0
    %311 = vmatprep.mubr.f32.mxu0 0.0
    %312 = vmatmul.mubr.f32.gmra.mrb[0].mxu0 %v223
    %v313 = vpop.f32.mrb[0].mxu0
    %v314 = vadd.f32 %v245, %v313
    %v315 = vpop.f32.mrb[0].mxu0
    %316 = vdwg.mxu0
    %317 = vst [vmem:[#allocation10] sm:$0xff] %v314
    // Predicated region
    $region54: #{tpu_custom_call.1} parent=1 // pred_check
      _
    $region55: #{tpu_custom_call.1} parent=1 // pred_check_branch
      %319 = sbr.rel (0) target = $region57
    $region56: #{tpu_custom_call.1} parent=1 // pred_region
      %s321 = ssub.s32 128, 128
      %322 = vsyncadd [#allocation4], %s321
      %s324 = sshll.u32 [#allocation10], 4
      %s325 = int_to_ptr.vmem [resolvable:$true] %s324
      %327 = dma.vmem_to_hbm [thread:$0]  %s325, 128, %s9, [#allocation4]
    $region57: #{tpu_custom_call.1} parent=1 // pred_fallthru
      _
    // Predicated region
    $region58: #{tpu_custom_call.1} parent=1 // pred_check
      _
    $region59: #{tpu_custom_call.1} parent=1 // pred_check_branch
      %329 = sbr.rel (0) target = $region61
    $region60: #{tpu_custom_call.1} parent=1 // pred_region
      %330 = dma.done [#allocation4], 128
    $region61: #{tpu_custom_call.1} parent=1 // pred_fallthru
      _
    %331 = vsyncpa [#allocation3], 1
    %332 = vsyncpa [#allocation7], 1
    %333 = vsyncpa [#allocation4], 1
    %334 = vsyncpa [#allocation5], 1

</llo_original>
